<compile_context>
chip_gen: v7x
topology: tpu7x:2x2x1
jax: 0.10.0
libtpu: 0.0.40
codegen_flags: <defaults>
</compile_context>

<pallas_src>
import jax
import jax.numpy as jnp
from jax.experimental import pallas as pl
from jax.experimental.pallas import tpu as pltpu


def _round_up(n, m):
    return ((n + m - 1) // m) * m


def _pad_to(a, shape):
    pads = [(0, t - s) for s, t in zip(a.shape, shape)]
    if any(p[1] for p in pads):
        return jnp.pad(a, pads)
    return a


def actor_kernel(x_ref, w1_ref, b1_ref, w2_ref, b2_ref, out_ref):
    # Cast the (tb, obs_dim) x tile to the MXU input dtype (tiny VPU op, no HBM cost).
    x = x_ref[...].astype(w1_ref.dtype)
    # Hidden layer: f32 accumulation on the MXU; bias + tanh stay f32 (v5e-safe epilogue).
    h = jnp.dot(x, w1_ref[...], preferred_element_type=jnp.float32)
    h = jnp.tanh(h + b1_ref[...])                      # (1, Hp) broadcasts over batch tile
    # Output layer: lane-dense (Hp, Ap) weight tile, f32 accumulation.
    logits = jnp.dot(h.astype(w2_ref.dtype), w2_ref[...],
                     preferred_element_type=jnp.float32)
    # Narrow store: only the real action_dim columns go back to HBM (masked vst; HBM write
    # bytes, not store slots, are what matters here).
    a = out_ref.shape[-1]
    out_ref[...] = (logits[:, :a] + b2_ref[...]).astype(out_ref.dtype)


def prepare_actor_params(w1, b1, w2, b2, *, use_bf16=True):
    """One-time weight prep (hoisted out of the per-call path).

    Pads hidden/output lanes to 128 (zero padding is numerically exact) and casts the
    matmul weights to the MXU input dtype. Biases stay f32 for the f32 epilogue; b2 is
    kept at its true width so the kernel can recover action_dim from its shape.
    """
    obs_dim, hidden = w1.shape
    action_dim = w2.shape[1]
    hp = _round_up(max(hidden, 1), 128)
    ap = _round_up(max(action_dim, 1), 128)
    mxu_dtype = jnp.bfloat16 if use_bf16 else jnp.float32

    w1p = _pad_to(w1, (obs_dim, hp)).astype(mxu_dtype)
    b1p = _pad_to(b1.reshape(1, hidden), (1, hp)).astype(jnp.float32)
    w2p = _pad_to(w2, (hp, ap)).astype(mxu_dtype)
    b2p = b2.reshape(1, action_dim).astype(jnp.float32)
    return {"w1": w1p, "b1": b1p, "w2": w2p, "b2": b2p}


def actor_forward(x, params, *, block_batch=4096):
    """logits = tanh(x @ W1 + b1) @ W2 + b2, fused in a single Pallas kernel."""
    batch, obs_dim = x.shape
    w1, b1, w2, b2 = params["w1"], params["b1"], params["w2"], params["b2"]
    hp = w1.shape[1]
    ap = w2.shape[1]
    action_dim = b2.shape[1]

    # Batch tile: sublane-aligned, big enough to amortize the fixed per-grid-step cost.
    tb = min(_round_up(block_batch, 8), _round_up(max(batch, 1), 8))
    # v7x megacore: guarantee >= 2 grid steps when the batch allows, so both TCs get work.
    if batch >= 16 and pl.cdiv(batch, tb) < 2:
        tb = _round_up(pl.cdiv(batch, 2), 8)
    grid = (pl.cdiv(max(batch, 1), tb),)     # ragged last tile; no jnp.pad copy of x

    w_itemsize = jnp.dtype(w1.dtype).itemsize
    cost = pl.CostEstimate(
        flops=int(2 * batch * obs_dim * hp + 2 * batch * hp * ap),
        transcendentals=int(batch * hp),
        bytes_accessed=int(
            batch * obs_dim * x.dtype.itemsize     # x read (no padded copy)
            + obs_dim * hp * w_itemsize            # w1 (read once, VMEM-resident)
            + hp * 4                               # b1
            + hp * ap * w_itemsize                 # w2
            + action_dim * 4                       # b2
            + batch * action_dim * 4               # narrow f32 output writeback
        ),
    )

    return pl.pallas_call(
        actor_kernel,
        out_shape=jax.ShapeDtypeStruct((batch, action_dim), jnp.float32),
        grid=grid,
        in_specs=[
            pl.BlockSpec((tb, obs_dim), lambda i: (i, 0)),   # x tile moves with grid
            pl.BlockSpec((obs_dim, hp), lambda i: (0, 0)),   # weights stay VMEM-resident
            pl.BlockSpec((1, hp), lambda i: (0, 0)),
            pl.BlockSpec((hp, ap), lambda i: (0, 0)),
            pl.BlockSpec((1, action_dim), lambda i: (0, 0)),
        ],
        out_specs=pl.BlockSpec((tb, action_dim), lambda i: (i, 0)),
        compiler_params=pltpu.CompilerParams(
            dimension_semantics=("parallel",),               # shards batch across TCs on v7x
        ),
        cost_estimate=cost,
    )(x, w1, b1, w2, b2)


def init_actor_params(key, obs_dim, action_dim, hidden=64):
    # Deterministic init mimicking nn.Linear's U(-1/sqrt(fan_in), 1/sqrt(fan_in)).
    k1, k2, k3, k4 = jax.random.split(key, 4)
    lim1 = 1.0 / jnp.sqrt(obs_dim)
    lim2 = 1.0 / jnp.sqrt(hidden)
    w1 = jax.random.uniform(k1, (obs_dim, hidden), jnp.float32, -lim1, lim1)
    b1 = jax.random.uniform(k2, (hidden,), jnp.float32, -lim1, lim1)
    w2 = jax.random.uniform(k3, (hidden, action_dim), jnp.float32, -lim2, lim2)
    b2 = jax.random.uniform(k4, (action_dim,), jnp.float32, -lim2, lim2)
    return w1, b1, w2, b2


if __name__ == "__main__":
    obs_dim, action_dim, hidden, batch = 8, 4, 64, 2

    key = jax.random.PRNGKey(0)
    k_params, k_x = jax.random.split(key)
    w1, b1, w2, b2 = init_actor_params(k_params, obs_dim, action_dim, hidden)
    x = jax.random.normal(k_x, (batch, obs_dim), jnp.float32)

    # Pure-JAX reference of the same math.
    ref = jnp.tanh(x @ w1 + b1) @ w2 + b2

    # f32 MXU path: exact-ish.
    params_f32 = prepare_actor_params(w1, b1, w2, b2, use_bf16=False)
    logits_f32 = jax.block_until_ready(actor_forward(x, params_f32))
    assert logits_f32.shape == (batch, action_dim)
    assert jnp.allclose(logits_f32, ref, atol=1e-5, rtol=1e-5)

    # bf16 MXU fast path (default): f32 accumulation + f32 bias/tanh epilogue.
    params_bf16 = prepare_actor_params(w1, b1, w2, b2, use_bf16=True)
    logits_bf16 = jax.block_until_ready(actor_forward(x, params_bf16))
    assert logits_bf16.shape == (batch, action_dim)
    assert jnp.allclose(logits_bf16, ref, atol=2e-2, rtol=2e-2)

    print("KERNEL_OK")
</pallas_src>

<mosaic_0001>
module attributes {stable_mosaic.version = 11 : i64} {
  func.func @actor_kernel(%arg0: i32, %arg1: memref<8x8xf32, #tpu.memory_space<vmem>>, %arg2: memref<8x128xf32, #tpu.memory_space<vmem>>, %arg3: memref<1x128xf32, #tpu.memory_space<vmem>>, %arg4: memref<128x128xf32, #tpu.memory_space<vmem>>, %arg5: memref<1x4xf32, #tpu.memory_space<vmem>>, %arg6: memref<8x4xf32, #tpu.memory_space<vmem>>) attributes {dimension_semantics = [#tpu.dimension_semantics<parallel>], iteration_bounds = array<i64: 1>, scalar_prefetch = 0 : i64, scratch_operands = 0 : i64, tpu.core_type = #tpu.core_type<tc>, window_params = [{transform_indices = @transform_0, window_bounds = array<i64: 8, 8>}, {pipeline_mode = #tpu.pipeline_mode<synchronous>, transform_indices = @transform_1, window_bounds = array<i64: 8, 128>}, {pipeline_mode = #tpu.pipeline_mode<synchronous>, transform_indices = @transform_2, window_bounds = array<i64: 1, 128>}, {pipeline_mode = #tpu.pipeline_mode<synchronous>, transform_indices = @transform_3, window_bounds = array<i64: 128, 128>}, {pipeline_mode = #tpu.pipeline_mode<synchronous>, transform_indices = @transform_4, window_bounds = array<i64: 1, 4>}, {transform_indices = @transform_5, window_bounds = array<i64: 8, 4>}]} {
    %c0 = arith.constant 0 : index
    %c0_0 = arith.constant 0 : index
    %0 = vector.load %arg1[%c0, %c0_0] : memref<8x8xf32, #tpu.memory_space<vmem>>, vector<8x8xf32>
    %c0_1 = arith.constant 0 : index
    %c0_2 = arith.constant 0 : index
    %1 = vector.load %arg2[%c0_1, %c0_2] : memref<8x128xf32, #tpu.memory_space<vmem>>, vector<8x128xf32>
    %cst = arith.constant dense<0.000000e+00> : vector<8x128xf32>
    %2 = tpu.matmul %0, %1, %cst {dimension_numbers = #tpu.dot_dimension_numbers<[1], [0], [0], [1], [0, 0, 1, 1], [], []>} : vector<8x8xf32>, vector<8x128xf32>, vector<8x128xf32> -> vector<8x128xf32>
    %c0_3 = arith.constant 0 : index
    %c0_4 = arith.constant 0 : index
    %3 = vector.load %arg3[%c0_3, %c0_4] : memref<1x128xf32, #tpu.memory_space<vmem>>, vector<1x128xf32>
    %4 = vector.broadcast %3 : vector<1x128xf32> to vector<8x128xf32>
    %5 = arith.addf %2, %4 : vector<8x128xf32>
    %6 = math.tanh %5 : vector<8x128xf32>
    %c0_5 = arith.constant 0 : index
    %c0_6 = arith.constant 0 : index
    %7 = vector.load %arg4[%c0_5, %c0_6] : memref<128x128xf32, #tpu.memory_space<vmem>>, vector<128x128xf32>
    %cst_7 = arith.constant dense<0.000000e+00> : vector<8x128xf32>
    %8 = tpu.matmul %6, %7, %cst_7 {dimension_numbers = #tpu.dot_dimension_numbers<[1], [0], [0], [1], [0, 0, 1, 1], [], []>} : vector<8x128xf32>, vector<128x128xf32>, vector<8x128xf32> -> vector<8x128xf32>
    %9 = vector.extract_strided_slice %8 {offsets = [0, 0], sizes = [8, 4], strides = [1, 1]} : vector<8x128xf32> to vector<8x4xf32>
    %c0_8 = arith.constant 0 : index
    %c0_9 = arith.constant 0 : index
    %10 = vector.load %arg5[%c0_8, %c0_9] : memref<1x4xf32, #tpu.memory_space<vmem>>, vector<1x4xf32>
    %11 = vector.broadcast %10 : vector<1x4xf32> to vector<8x4xf32>
    %12 = arith.addf %9, %11 : vector<8x4xf32>
    %c0_10 = arith.constant 0 : index
    %c0_11 = arith.constant 0 : index
    %13 = vector.load %arg6[%c0_10, %c0_11] : memref<8x4xf32, #tpu.memory_space<vmem>>, vector<8x4xf32>
    tpu.vector_store %arg6[%c0_10, %c0_11], %12 {strides = array<i32>} : memref<8x4xf32, #tpu.memory_space<vmem>>, vector<8x4xf32>,
    return
  }
  func.func @transform_0(%arg0: i32) -> (i32, i32) {
    %c0_i32 = arith.constant 0 : i32
    %c0_i32_0 = arith.constant 0 : i32
    return %arg0, %c0_i32 : i32, i32
  }
  func.func @transform_1(%arg0: i32) -> (i32, i32) {
    %c0_i32 = arith.constant 0 : i32
    %c0_i32_0 = arith.constant 0 : i32
    %c0_i32_1 = arith.constant 0 : i32
    return %c0_i32, %c0_i32_0 : i32, i32
  }
  func.func @transform_2(%arg0: i32) -> (i32, i32) {
    %c0_i32 = arith.constant 0 : i32
    %c0_i32_0 = arith.constant 0 : i32
    %c0_i32_1 = arith.constant 0 : i32
    return %c0_i32, %c0_i32_0 : i32, i32
  }
  func.func @transform_3(%arg0: i32) -> (i32, i32) {
    %c0_i32 = arith.constant 0 : i32
    %c0_i32_0 = arith.constant 0 : i32
    %c0_i32_1 = arith.constant 0 : i32
    return %c0_i32, %c0_i32_0 : i32, i32
  }
  func.func @transform_4(%arg0: i32) -> (i32, i32) {
    %c0_i32 = arith.constant 0 : i32
    %c0_i32_0 = arith.constant 0 : i32
    %c0_i32_1 = arith.constant 0 : i32
    return %c0_i32, %c0_i32_0 : i32, i32
  }
  func.func @transform_5(%arg0: i32) -> (i32, i32) {
    %c0_i32 = arith.constant 0 : i32
    %c0_i32_0 = arith.constant 0 : i32
    return %arg0, %c0_i32 : i32, i32
  }
}

</mosaic_0001>

<llo_original>
// kernel: tpu_custom_call.1
$region0: #{tpu_custom_call.1}
  #allocation0 [shape = 'u32[]', space=smem, size = 0x4, offset = 0x4, fixed_abs, tag = 'smem constant byte address 0x4 - core index']
  #allocation1 [shape = 'u32[144,128]{1,0:T(1,128)}', space=vmem, size = 0x12000, scoped, tag = 'internal scratch']
  %s0 = inlined_call_operand.hbm [shape: f32[2,8], index: 0, kind: input, shape index: {}]
  %s1 = inlined_call_operand.hbm [shape: f32[8,128], index: 1, kind: input, shape index: {}]
  %s2 = inlined_call_operand.vmem [shape: f32[1,128], index: 2, kind: input, shape index: {}]
  %s3 = inlined_call_operand.hbm [shape: f32[128,128], index: 3, kind: input, shape index: {}]
  %s4 = inlined_call_operand.vmem [shape: f32[1,4], index: 4, kind: input, shape index: {}]
  %s5 = inlined_call_operand.hbm [shape: f32[2,4], index: 5, kind: output, shape index: {}]
  %s6 = sld [smem:[#allocation0]]
  $region42: #{tpu_custom_call.1} parent=0
    _
  %s8 = ssub.s32 1, %s6
  %s9 = scalar_select 0, %s8, %s6
  $region1: #{tpu_custom_call.1} parent=0
    #allocation2 [shape = 'u8[4096]{0}', space=vmem, size = 0x1000, scoped, tag = 'input window, operand 0, single buffered']
    #allocation3 [shape = 's32[1]{0}', space=sflag, size = 0x4, scoped, tag = 'scoped memory for tpu_custom_call.1']
    #allocation4 [shape = 's32[1]{0}', space=sflag, size = 0x4, scoped, tag = 'scoped memory for tpu_custom_call.1']
    #allocation5 [shape = 'u8[4096]{0}', space=vmem, size = 0x1000, scoped, tag = 'input window, operand 1, single buffered']
    #allocation6 [shape = 's32[1]{0}', space=sflag, size = 0x4, scoped, tag = 'scoped memory for tpu_custom_call.1']
    #allocation7 [shape = 'u8[65536]{0}', space=vmem, size = 0x10000, scoped, tag = 'input window, operand 3, single buffered']
    #allocation8 [shape = 'u8[4096]{0}', space=vmem, size = 0x1000, scoped, tag = 'output window, operand 0, single buffered']
    %10 = vsyncpa [#allocation3], 0
    %11 = vsyncpa [#allocation6], 0
    %12 = vsyncpa [#allocation4], 0
    // Predicated region
    $region2: #{tpu_custom_call.1} parent=1 // pred_check
      _
    $region3: #{tpu_custom_call.1} parent=1 // pred_check_branch
      %14 = sbr.rel (0) target = $region5
    $region4: #{tpu_custom_call.1} parent=1 // pred_region
      %s16 = ssub.s32 128, 32
      %17 = vsyncadd [#allocation3], %s16
      %s18 = sshll.u32 [#allocation2], 4
      %s19 = int_to_ptr.vmem [resolvable:$true] %s18
      %24 = dma.hbm_to_vmem [thread:$0]  %s0, 32, %s19, [#allocation3], 32, 32, 2
    $region5: #{tpu_custom_call.1} parent=1 // pred_fallthru
      _
    // Predicated region
    $region6: #{tpu_custom_call.1} parent=1 // pred_check
      _
    $region7: #{tpu_custom_call.1} parent=1 // pred_check_branch
      %26 = sbr.rel (0) target = $region9
    $region8: #{tpu_custom_call.1} parent=1 // pred_region
      %s28 = ssub.s32 128, 128
      %29 = vsyncadd [#allocation6], %s28
      %s31 = sshll.u32 [#allocation5], 4
      %s32 = int_to_ptr.vmem [resolvable:$true] %s31
      %34 = dma.hbm_to_vmem [thread:$0]  %s1, 128, %s32, [#allocation6]
    $region9: #{tpu_custom_call.1} parent=1 // pred_fallthru
      _
    // Predicated region
    $region10: #{tpu_custom_call.1} parent=1 // pred_check
      _
    $region11: #{tpu_custom_call.1} parent=1 // pred_check_branch
      %36 = sbr.rel (0) target = $region13
    $region12: #{tpu_custom_call.1} parent=1 // pred_region
      _
    $region13: #{tpu_custom_call.1} parent=1 // pred_fallthru
      _
    // Predicated region
    $region14: #{tpu_custom_call.1} parent=1 // pred_check
      _
    $region15: #{tpu_custom_call.1} parent=1 // pred_check_branch
      %38 = sbr.rel (0) target = $region17
    $region16: #{tpu_custom_call.1} parent=1 // pred_region
      %s40 = ssub.s32 2048, 2048
      %41 = vsyncadd [#allocation6], %s40
      %s42 = sshll.u32 [#allocation7], 4
      %s43 = int_to_ptr.vmem [resolvable:$true] %s42
      %48 = dma.hbm_to_vmem [thread:$0]  %s3, 2048, %s43, [#allocation6], 128, 128, 8
    $region17: #{tpu_custom_call.1} parent=1 // pred_fallthru
      _
    // Predicated region
    $region18: #{tpu_custom_call.1} parent=1 // pred_check
      _
    $region19: #{tpu_custom_call.1} parent=1 // pred_check_branch
      %50 = sbr.rel (0) target = $region21
    $region20: #{tpu_custom_call.1} parent=1 // pred_region
      _
    $region21: #{tpu_custom_call.1} parent=1 // pred_fallthru
      _
    // Predicated region
    $region22: #{tpu_custom_call.1} parent=1 // pred_check
      _
    $region23: #{tpu_custom_call.1} parent=1 // pred_check_branch
      %52 = sbr.rel (0) target = $region25
    $region24: #{tpu_custom_call.1} parent=1 // pred_region
      %53 = dma.done [#allocation3], 128
    $region25: #{tpu_custom_call.1} parent=1 // pred_fallthru
      _
    // Predicated region
    $region26: #{tpu_custom_call.1} parent=1 // pred_check
      _
    $region27: #{tpu_custom_call.1} parent=1 // pred_check_branch
      %55 = sbr.rel (0) target = $region29
    $region28: #{tpu_custom_call.1} parent=1 // pred_region
      %56 = dma.done [#allocation6], 128
    $region29: #{tpu_custom_call.1} parent=1 // pred_fallthru
      _
    // Predicated region
    $region30: #{tpu_custom_call.1} parent=1 // pred_check
      _
    $region31: #{tpu_custom_call.1} parent=1 // pred_check_branch
      %58 = sbr.rel (0) target = $region33
    $region32: #{tpu_custom_call.1} parent=1 // pred_region
      %59 = dma.done [#allocation6], 2048
    $region33: #{tpu_custom_call.1} parent=1 // pred_fallthru
      _
    %v60 = vld [vmem:[#allocation2] sm:$0xff]
    %v61 = vld [vmem:[#allocation5] sm:$0xff]
    %v62 = vld [vmem:[%s2] sm:$0x1]
    %v64 = vlaneseq
    %v65 = vshrl.u32 %v64, 7
    %v66 = vsub.s32 0, %v65
    %v67 = vrot.slane %v62, %v66
    %vm69 = vcmask 64512
    %v71 = vsel %vm69, %v60, 0
    %73 = vmatprep.subr.mxu0 0.0
    %74 = vmatpush1.msra.mxu0 %v61
    %75 = vmatprep.subr.mxu0 0.0
    %76 = vmatpush1.msra.mxu0 0.0
    %77 = vmatprep.subr.mxu0 0.0
    %78 = vmatpush1.msra.mxu0 0.0
    %79 = vmatprep.subr.mxu0 0.0
    %80 = vmatpush1.msra.mxu0 0.0
    %81 = vmatprep.subr.mxu0 0.0
    %82 = vmatpush1.msra.mxu0 0.0
    %83 = vmatprep.subr.mxu0 0.0
    %84 = vmatpush1.msra.mxu0 0.0
    %85 = vmatprep.subr.mxu0 0.0
    %86 = vmatpush1.msra.mxu0 0.0
    %87 = vmatprep.subr.mxu0 0.0
    %88 = vmatpush1.msra.mxu0 0.0
    %89 = vmatprep.subr.mxu0 0.0
    %90 = vmatpush1.msra.mxu0 0.0
    %91 = vmatprep.subr.mxu0 0.0
    %92 = vmatpush1.msra.mxu0 0.0
    %93 = vmatprep.subr.mxu0 0.0
    %94 = vmatpush1.msra.mxu0 0.0
    %95 = vmatprep.subr.mxu0 0.0
    %96 = vmatpush1.msra.mxu0 0.0
    %97 = vmatprep.subr.mxu0 0.0
    %98 = vmatpush1.msra.mxu0 0.0
    %99 = vmatprep.subr.mxu0 0.0
    %100 = vmatpush1.msra.mxu0 0.0
    %101 = vmatprep.subr.mxu0 0.0
    %102 = vmatpush1.msra.mxu0 0.0
    %103 = vmatprep.subr.mxu0 0.0
    %104 = vmatpush1.msra.mxu0 0.0
    %105 = vmatprep.subr.mxu0 0.0
    %106 = vmatpush1.msra.mxu0 0.0
    %107 = vmatprep.subr.mxu0 0.0
    %108 = vmatpush1.msra.mxu0 0.0
    %109 = vmatprep.subr.mxu0 0.0
    %110 = vmatpush1.msra.mxu0 0.0
    %111 = vmatprep.subr.mxu0 0.0
    %112 = vmatpush1.msra.mxu0 0.0
    %113 = vmatprep.subr.mxu0 0.0
    %114 = vmatpush1.msra.mxu0 0.0
    %115 = vmatprep.subr.mxu0 0.0
    %116 = vmatpush1.msra.mxu0 0.0
    %117 = vmatprep.subr.mxu0 0.0
    %118 = vmatpush1.msra.mxu0 0.0
    %119 = vmatprep.subr.mxu0 0.0
    %120 = vmatpush1.msra.mxu0 0.0
    %121 = vmatprep.subr.mxu0 0.0
    %122 = vmatpush1.msra.mxu0 0.0
    %123 = vmatprep.subr.mxu0 0.0
    %124 = vmatpush1.msra.mxu0 0.0
    %125 = vmatprep.subr.mxu0 0.0
    %126 = vmatpush1.msra.mxu0 0.0
    %127 = vmatprep.subr.mxu0 0.0
    %128 = vmatpush1.msra.mxu0 0.0
    %129 = vmatprep.subr.mxu0 0.0
    %130 = vmatpush1.msra.mxu0 0.0
    %131 = vmatprep.subr.mxu0 0.0
    %132 = vmatpush1.msra.mxu0 0.0
    %133 = vmatprep.subr.mxu0 0.0
    %134 = vmatpush1.msra.mxu0 0.0
    %135 = vmatprep.subr.mxu0 0.0
    %136 = vmatpush1.msra.mxu0 0.0
    %137 = vmatprep.mubr.f32.mxu0 0.0
    %138 = vmatmul.mubr.f32.gmra.mrb[0].mxu0 %v71
    %v139 = vpop.f32.mrb[0].mxu0
    %v140 = vadd.f32 %v67, %v139
    %v141 = vpop.f32.mrb[0].mxu0
    %142 = vdwg.mxu0
    %v143 = vtanh.pop %v140
    %v144 = vld [vmem:[#allocation7] sm:$0xff]
    %v145 = vld [vmem:[#allocation7 + $0x8] sm:$0xff]
    %v146 = vld [vmem:[#allocation7 + $0x10] sm:$0xff]
    %v147 = vld [vmem:[#allocation7 + $0x18] sm:$0xff]
    %v148 = vld [vmem:[#allocation7 + $0x20] sm:$0xff]
    %v149 = vld [vmem:[#allocation7 + $0x28] sm:$0xff]
    %v150 = vld [vmem:[#allocation7 + $0x30] sm:$0xff]
    %v151 = vld [vmem:[#allocation7 + $0x38] sm:$0xff]
    %v152 = vld [vmem:[#allocation7 + $0x40] sm:$0xff]
    %v153 = vld [vmem:[#allocation7 + $0x48] sm:$0xff]
    %v154 = vld [vmem:[#allocation7 + $0x50] sm:$0xff]
    %v155 = vld [vmem:[#allocation7 + $0x58] sm:$0xff]
    %v156 = vld [vmem:[#allocation7 + $0x60] sm:$0xff]
    %v157 = vld [vmem:[#allocation7 + $0x68] sm:$0xff]
    %v158 = vld [vmem:[#allocation7 + $0x70] sm:$0xff]
    %v159 = vld [vmem:[#allocation7 + $0x78] sm:$0xff]
    %160 = vmatprep.subr.mxu0 0.0
    %161 = vmatpush1.msra.mxu0 %v144
    %162 = vmatprep.subr.mxu0 0.0
    %163 = vmatpush1.msra.mxu0 %v145
    %164 = vmatprep.subr.mxu0 0.0
    %165 = vmatpush1.msra.mxu0 %v146
    %166 = vmatprep.subr.mxu0 0.0
    %167 = vmatpush1.msra.mxu0 %v147
    %168 = vmatprep.subr.mxu0 0.0
    %169 = vmatpush1.msra.mxu0 %v148
    %170 = vmatprep.subr.mxu0 0.0
    %171 = vmatpush1.msra.mxu0 %v149
    %172 = vmatprep.subr.mxu0 0.0
    %173 = vmatpush1.msra.mxu0 %v150
    %174 = vmatprep.subr.mxu0 0.0
    %175 = vmatpush1.msra.mxu0 %v151
    %176 = vmatprep.subr.mxu0 0.0
    %177 = vmatpush1.msra.mxu0 %v152
    %178 = vmatprep.subr.mxu0 0.0
    %179 = vmatpush1.msra.mxu0 %v153
    %180 = vmatprep.subr.mxu0 0.0
    %181 = vmatpush1.msra.mxu0 %v154
    %182 = vmatprep.subr.mxu0 0.0
    %183 = vmatpush1.msra.mxu0 %v155
    %184 = vmatprep.subr.mxu0 0.0
    %185 = vmatpush1.msra.mxu0 %v156
    %186 = vmatprep.subr.mxu0 0.0
    %187 = vmatpush1.msra.mxu0 %v157
    %188 = vmatprep.subr.mxu0 0.0
    %189 = vmatpush1.msra.mxu0 %v158
    %190 = vmatprep.subr.mxu0 0.0
    %191 = vmatpush1.msra.mxu0 %v159
    %192 = vmatprep.subr.mxu0 0.0
    %193 = vmatpush1.msra.mxu0 0.0
    %194 = vmatprep.subr.mxu0 0.0
    %195 = vmatpush1.msra.mxu0 0.0
    %196 = vmatprep.subr.mxu0 0.0
    %197 = vmatpush1.msra.mxu0 0.0
    %198 = vmatprep.subr.mxu0 0.0
    %199 = vmatpush1.msra.mxu0 0.0
    %200 = vmatprep.subr.mxu0 0.0
    %201 = vmatpush1.msra.mxu0 0.0
    %202 = vmatprep.subr.mxu0 0.0
    %203 = vmatpush1.msra.mxu0 0.0
    %204 = vmatprep.subr.mxu0 0.0
    %205 = vmatpush1.msra.mxu0 0.0
    %206 = vmatprep.subr.mxu0 0.0
    %207 = vmatpush1.msra.mxu0 0.0
    %208 = vmatprep.subr.mxu0 0.0
    %209 = vmatpush1.msra.mxu0 0.0
    %210 = vmatprep.subr.mxu0 0.0
    %211 = vmatpush1.msra.mxu0 0.0
    %212 = vmatprep.subr.mxu0 0.0
    %213 = vmatpush1.msra.mxu0 0.0
    %214 = vmatprep.subr.mxu0 0.0
    %215 = vmatpush1.msra.mxu0 0.0
    %216 = vmatprep.subr.mxu0 0.0
    %217 = vmatpush1.msra.mxu0 0.0
    %218 = vmatprep.subr.mxu0 0.0
    %219 = vmatpush1.msra.mxu0 0.0
    %220 = vmatprep.subr.mxu0 0.0
    %221 = vmatpush1.msra.mxu0 0.0
    %222 = vmatprep.subr.mxu0 0.0
    %223 = vmatpush1.msra.mxu0 0.0
    %224 = vmatprep.mubr.f32.mxu0 0.0
    %225 = vmatmul.mubr.f32.gmra.mrb[0].mxu0 %v143
    %v226 = vpop.f32.mrb[0].mxu0
    %v227 = vadd.f32 0.0, %v226
    %v228 = vpop.f32.mrb[0].mxu0
    %229 = vdwg.mxu0
    %v230 = vld [vmem:[%s4] sm:$0x1]
    %v232 = vlaneseq
    %v233 = vshrl.u32 %v232, 7
    %v234 = vsub.s32 0, %v233
    %v235 = vrot.slane %v230, %v234
    %v237 = vadd.f32 %v227, %v235
    %vm238 = vcmask 31744
    %239 = vst.msk [vmem:[#allocation8] sm:$0xff] %vm238, %v237
    // Predicated region
    $region34: #{tpu_custom_call.1} parent=1 // pred_check
      _
    $region35: #{tpu_custom_call.1} parent=1 // pred_check_branch
      %241 = sbr.rel (0) target = $region37
    $region36: #{tpu_custom_call.1} parent=1 // pred_region
      %s243 = ssub.s32 128, 32
      %244 = vsyncadd [#allocation4], %s243
      %s245 = sshll.u32 [#allocation8], 4
      %s246 = int_to_ptr.vmem [resolvable:$true] %s245
      %251 = dma.vmem_to_hbm [thread:$0]  %s246, 32, %s5, [#allocation4], 32, 32, 2
    $region37: #{tpu_custom_call.1} parent=1 // pred_fallthru
      _
    // Predicated region
    $region38: #{tpu_custom_call.1} parent=1 // pred_check
      _
    $region39: #{tpu_custom_call.1} parent=1 // pred_check_branch
      %253 = sbr.rel (0) target = $region41
    $region40: #{tpu_custom_call.1} parent=1 // pred_region
      %254 = dma.done [#allocation4], 128
    $region41: #{tpu_custom_call.1} parent=1 // pred_fallthru
      _
    %255 = vsyncpa [#allocation3], 1
    %256 = vsyncpa [#allocation6], 1
    %257 = vsyncpa [#allocation4], 1

</llo_original>
